<compile_context>
chip_gen: v7x
topology: tpu7x:2x2x1
jax: 0.10.0
libtpu: 0.0.40
codegen_flags: <defaults>
</compile_context>

<pallas_src>
import jax
import jax.numpy as jnp
from jax.experimental import pallas as pl
from jax.experimental.pallas import tpu as pltpu


def _norm_kernel(x_ref, scale_ref, shift_ref, o_ref):
    # x_ref: (row_block, col_block) tile of the flattened (N*C, H*W) image.
    # scale_ref / shift_ref: (row_block, 1) per-row constants, broadcast on lanes.
    x = x_ref[...].astype(jnp.float32)
    o_ref[...] = (x * scale_ref[...] + shift_ref[...]).astype(o_ref.dtype)


def _choose_blocks(rows, cols, itemsize, target_bytes=4 << 20):
    """Pick (row_block, col_block) for the flattened (rows, cols) view.

      * col_block is a multiple of 128 (lane-dense) or equals cols.
      * row_block is a multiple of the dtype-aware sublane count or equals rows.
      * one block stays ~<= target_bytes (~4 MiB) so 2x(in+out) buffering fits
        scoped VMEM on every generation.
      * columns are split when the row axis alone can't provide pipelining /
        megacore parallelism, guaranteeing >= 2 grid programs when possible.
    """
    sub = max(8, 32 // max(itemsize, 1))      # 8 f32, 16 bf16/fp16, 32 int8/fp8
    rb_min = rows if rows < sub else sub      # smallest legal row block

    col_block = cols
    if cols % 128 == 0 and cols > 128:
        full_width_fits = rb_min * cols * itemsize <= target_bytes
        if rows < 64 or not full_width_fits:
            cb = (target_bytes // max(rb_min * itemsize, 1)) // 128 * 128
            cb = int(min(cols, max(128, cb)))
            # If the row axis collapses to a single block, make sure the column
            # axis gives >= 2 programs (keeps both v7x TensorCores busy).
            if rows <= rb_min and cb >= cols:
                cb = max(128, ((cols // 2) // 128) * 128)
            col_block = cb
    # TODO(synk): if H*W is not a multiple of 128 (e.g. 14*14) the single
    # full-width block keeps lane-edge masking; a repack would be needed to fix it.

    max_rows = max(1, target_bytes // max(col_block * itemsize, 1))
    if max_rows >= rows:
        row_block = rows
    else:
        row_block = max(rb_min, (max_rows // sub) * sub)
    return int(row_block), int(col_block)


@jax.jit
def normalization_forward(image, mean, std):
    """Returns (image - mean[:, None, None]) / std[:, None, None] for NCHW image."""
    if not jnp.issubdtype(image.dtype, jnp.floating):
        raise TypeError(
            f"Normalization expects a floating-point image, got {image.dtype}.")

    n, c, h, w = image.shape
    rows, cols = n * c, h * w
    itemsize = image.dtype.itemsize

    # Free reshape of a contiguous NCHW array; lane-dense last dim.
    x2d = image.reshape(rows, cols)

    # Fold per-channel mean/std into per-row scale/shift (N*C floats each):
    #   (x - mean) / std  ==  x * (1/std) + (-mean/std)
    inv_std = 1.0 / std.astype(jnp.float32)
    scale = jnp.broadcast_to(inv_std[None, :], (n, c)).reshape(rows, 1)
    shift = jnp.broadcast_to((-mean.astype(jnp.float32) * inv_std)[None, :],
                             (n, c)).reshape(rows, 1)

    row_block, col_block = _choose_blocks(rows, cols, itemsize)
    grid = (pl.cdiv(rows, row_block), pl.cdiv(cols, col_block))

    block_bytes = row_block * col_block * itemsize
    # Double-buffered input + output tiles (+ tiny scale/shift slivers), capped
    # below v7x's 64 MiB physical VMEM per TensorCore.
    vmem_limit = int(min(64 << 20, max(32 << 20, 5 * block_bytes)))

    cost = pl.CostEstimate(
        flops=2 * rows * cols,
        bytes_accessed=2 * rows * cols * itemsize + 2 * rows * 4,
        transcendentals=0,
    )

    out2d = pl.pallas_call(
        _norm_kernel,
        out_shape=jax.ShapeDtypeStruct((rows, cols), image.dtype),
        grid_spec=pltpu.PrefetchScalarGridSpec(
            num_scalar_prefetch=0,
            grid=grid,
            in_specs=[
                pl.BlockSpec((row_block, col_block), lambda i, j: (i, j)),
                # Row-only dependence: block index repeats along the inner
                # (column) grid axis, so Pallas skips re-copying these.
                pl.BlockSpec((row_block, 1), lambda i, j: (i, 0)),
                pl.BlockSpec((row_block, 1), lambda i, j: (i, 0)),
            ],
            out_specs=pl.BlockSpec((row_block, col_block), lambda i, j: (i, j)),
        ),
        compiler_params=pltpu.CompilerParams(
            dimension_semantics=("parallel", "parallel"),
            vmem_limit_bytes=vmem_limit,
        ),
        cost_estimate=cost,
    )(x2d, scale, shift)

    return out2d.reshape(n, c, h, w)


if __name__ == "__main__":
    key = jax.random.PRNGKey(0)
    shape = (2, 4, 16, 16)  # (N, C, H, W)
    image = jax.random.normal(key, shape, dtype=jnp.float32)
    # Per-channel mean/std (C=4), torchvision-style constants.
    mean = jnp.array([0.485, 0.456, 0.406, 0.500], dtype=jnp.float32)
    std = jnp.array([0.229, 0.224, 0.225, 0.250], dtype=jnp.float32)

    out = normalization_forward(image, mean, std)
    out = jax.block_until_ready(out)

    # Reference: exact PyTorch broadcast semantics, mean/std viewed as (-1, 1, 1).
    ref = (image - mean.reshape(-1, 1, 1)) / std.reshape(-1, 1, 1)

    assert out.shape == image.shape
    assert out.dtype == image.dtype
    assert jnp.allclose(out, ref, rtol=1e-5, atol=1e-5), (
        float(jnp.max(jnp.abs(out - ref))))

    print("KERNEL_OK")
</pallas_src>

<mosaic_0001>
module attributes {stable_mosaic.version = 11 : i64} {
  func.func @_norm_kernel(%arg0: i32, %arg1: i32, %arg2: memref<8x128xf32, #tpu.memory_space<vmem>>, %arg3: memref<8x1xf32, #tpu.memory_space<vmem>>, %arg4: memref<8x1xf32, #tpu.memory_space<vmem>>, %arg5: memref<8x128xf32, #tpu.memory_space<vmem>>) attributes {dimension_semantics = [#tpu.dimension_semantics<parallel>, #tpu.dimension_semantics<parallel>], iteration_bounds = array<i64: 1, 2>, scalar_prefetch = 0 : i64, scratch_operands = 0 : i64, tpu.core_type = #tpu.core_type<tc>, window_params = [{transform_indices = @transform_0, window_bounds = array<i64: 8, 128>}, {transform_indices = @transform_1, window_bounds = array<i64: 8, 1>}, {transform_indices = @transform_2, window_bounds = array<i64: 8, 1>}, {transform_indices = @transform_3, window_bounds = array<i64: 8, 128>}]} {
    %c0 = arith.constant 0 : index
    %c0_0 = arith.constant 0 : index
    %0 = vector.load %arg2[%c0, %c0_0] : memref<8x128xf32, #tpu.memory_space<vmem>>, vector<8x128xf32>
    %c0_1 = arith.constant 0 : index
    %c0_2 = arith.constant 0 : index
    %1 = vector.load %arg3[%c0_1, %c0_2] : memref<8x1xf32, #tpu.memory_space<vmem>>, vector<8x1xf32>
    %2 = vector.broadcast %1 : vector<8x1xf32> to vector<8x128xf32>
    %3 = arith.mulf %0, %2 : vector<8x128xf32>
    %c0_3 = arith.constant 0 : index
    %c0_4 = arith.constant 0 : index
    %4 = vector.load %arg4[%c0_3, %c0_4] : memref<8x1xf32, #tpu.memory_space<vmem>>, vector<8x1xf32>
    %5 = vector.broadcast %4 : vector<8x1xf32> to vector<8x128xf32>
    %6 = arith.addf %3, %5 : vector<8x128xf32>
    %c0_5 = arith.constant 0 : index
    %c0_6 = arith.constant 0 : index
    %7 = vector.load %arg5[%c0_5, %c0_6] : memref<8x128xf32, #tpu.memory_space<vmem>>, vector<8x128xf32>
    tpu.vector_store %arg5[%c0_5, %c0_6], %6 {strides = array<i32>} : memref<8x128xf32, #tpu.memory_space<vmem>>, vector<8x128xf32>,
    return
  }
  func.func @transform_0(%arg0: i32, %arg1: i32) -> (i32, i32) {
    %c0_i32 = arith.constant 0 : i32
    return %arg0, %arg1 : i32, i32
  }
  func.func @transform_1(%arg0: i32, %arg1: i32) -> (i32, i32) {
    %c0_i32 = arith.constant 0 : i32
    %c0_i32_0 = arith.constant 0 : i32
    return %arg0, %c0_i32 : i32, i32
  }
  func.func @transform_2(%arg0: i32, %arg1: i32) -> (i32, i32) {
    %c0_i32 = arith.constant 0 : i32
    %c0_i32_0 = arith.constant 0 : i32
    return %arg0, %c0_i32 : i32, i32
  }
  func.func @transform_3(%arg0: i32, %arg1: i32) -> (i32, i32) {
    %c0_i32 = arith.constant 0 : i32
    return %arg0, %arg1 : i32, i32
  }
}

</mosaic_0001>

<llo_original>
// kernel: normalization_forward.1
$region0: #{normalization_forward.1}
  #allocation0 [shape = 'u32[]', space=smem, size = 0x4, offset = 0x4, fixed_abs, tag = 'smem constant byte address 0x4 - core index']
  #allocation1 [shape = 'u32[144,128]{1,0:T(1,128)}', space=vmem, size = 0x12000, scoped, tag = 'internal scratch']
  %s0 = inlined_call_operand.vmem [shape: f32[8,256], index: 0, kind: input, shape index: {}]
  %s1 = inlined_call_operand.vmem [shape: f32[8,1], index: 1, kind: input, shape index: {}]
  %s2 = inlined_call_operand.vmem [shape: f32[8,1], index: 2, kind: input, shape index: {}]
  %s3 = inlined_call_operand.vmem [shape: f32[8,256], index: 3, kind: output, shape index: {}]
  %s4 = sld [smem:[#allocation0]]
  $region45: #{normalization_forward.1} parent=0
    _
  %s6 = ssub.s32 1, %s4
  %s7 = scalar_select 0, %s6, %s4
  loop: start=0, step=1, limit=4
  $region2: #{normalization_forward.1} parent=0 // loop_pre_header
    _
  $region3: #{normalization_forward.1} parent=0 // loop_header
    %s9 = sphi 0, %s13
    %p10 = scmp.ge.s32.totalorder %s9, 4
    %s16 = sphi 0, %s28
    %s17 = sphi 0, %s24
    %s18 = sphi 0, %s16
    %s19 = sphi 0, %s17
    %s20 = sphi 0, %s18
    %s21 = sphi 0, %s19
    %s33 = sphi 0, %s35
    %s36 = sphi 0, %s33
    %s37 = sphi 0, %s36
    %s53 = sphi 0, %s37
    %s59 = sphi 0, %s61
    %s62 = sphi 0, %s59
    %s63 = sphi 0, %s62
    %s79 = sphi 0, %s63
    %s85 = sphi 0, %s87
    %s88 = sphi 0, %s85
    %s89 = sphi 0, %s88
    %s105 = sphi 0, %s89
    %s113 = sphi 0, %s115
    %s116 = sphi 0, %s113
    %s117 = sphi 0, %s116
    %s133 = sphi 0, %s117
  $region4: #{normalization_forward.1} parent=0 // loop_header_branch
    %12 = sbr.rel (%p10) target = $region8
  $region5: #{normalization_forward.1} parent=0 // loop_body
    %s14 = ssub.s32 %s9, 1
    %s15 = ssub.s32 %s9, 2
    %s22 = sadd.s32 1, %s17
    %p23 = scmp.ge.s32.totalorder %s22, 2
    %s24 = scalar_select %p23, 0, %s22
    %s25 = sadd.s32 1, %s16
    %s26 = scalar_select %p23, %s25, %s16
    %p27 = scmp.ge.s32.totalorder %s26, 1
    %s28 = scalar_select %p27, 0, %s26
    %s29 = ssub.s32 %s16, %s28
    %s30 = ssub.s32 %s17, %s24
    %s31 = sor.u32 %s29, %s30
    %p32 = scmp.eq.s32.totalorder %s31, 0
    %s34 = sadd.s32 %s33, 1
    %s35 = scalar_select %p32, %s33, %s34
    %p38 = pneg %p32
    %p39 = scmp.eq.s32.totalorder %s9, 1
    %p40 = por %p38, %p39
    %p41 = scmp.ne.s32.totalorder %s33, %s36
    %p42 = scmp.eq.s32.totalorder %s9, 0
    %p43 = por %p41, %p42
    %p44 = scmp.ne.s32.totalorder %s33, %s36
    %p45 = scmp.eq.s32.totalorder %s14, 1
    %p46 = por %p44, %p45
    %p47 = scmp.ne.s32.totalorder %s36, %s37
    %p48 = scmp.eq.s32.totalorder %s14, 0
    %p49 = por %p47, %p48
    %p50 = scmp.ne.s32.totalorder %s36, %s37
    %p51 = scmp.eq.s32.totalorder %s15, 1
    %p52 = por %p50, %p51
    %p54 = scmp.ne.s32.totalorder %s37, %s53
    %p55 = scmp.eq.s32.totalorder %s15, 0
    %p56 = por %p54, %p55
    %s57 = ssub.s32 %s16, %s28
    %p58 = scmp.eq.s32.totalorder %s57, 0
    %s60 = sadd.s32 %s59, 1
    %s61 = scalar_select %p58, %s59, %s60
    %p64 = pneg %p58
    %p65 = scmp.eq.s32.totalorder %s9, 1
    %p66 = por %p64, %p65
    %p67 = scmp.ne.s32.totalorder %s59, %s62
    %p68 = scmp.eq.s32.totalorder %s9, 0
    %p69 = por %p67, %p68
    %p70 = scmp.ne.s32.totalorder %s59, %s62
    %p71 = scmp.eq.s32.totalorder %s14, 1
    %p72 = por %p70, %p71
    %p73 = scmp.ne.s32.totalorder %s62, %s63
    %p74 = scmp.eq.s32.totalorder %s14, 0
    %p75 = por %p73, %p74
    %p76 = scmp.ne.s32.totalorder %s62, %s63
    %p77 = scmp.eq.s32.totalorder %s15, 1
    %p78 = por %p76, %p77
    %p80 = scmp.ne.s32.totalorder %s63, %s79
    %p81 = scmp.eq.s32.totalorder %s15, 0
    %p82 = por %p80, %p81
    %s83 = ssub.s32 %s16, %s28
    %p84 = scmp.eq.s32.totalorder %s83, 0
    %s86 = sadd.s32 %s85, 1
    %s87 = scalar_select %p84, %s85, %s86
    %p90 = pneg %p84
    %p91 = scmp.eq.s32.totalorder %s9, 1
    %p92 = por %p90, %p91
    %p93 = scmp.ne.s32.totalorder %s85, %s88
    %p94 = scmp.eq.s32.totalorder %s9, 0
    %p95 = por %p93, %p94
    %p96 = scmp.ne.s32.totalorder %s85, %s88
    %p97 = scmp.eq.s32.totalorder %s14, 1
    %p98 = por %p96, %p97
    %p99 = scmp.ne.s32.totalorder %s88, %s89
    %p100 = scmp.eq.s32.totalorder %s14, 0
    %p101 = por %p99, %p100
    %p102 = scmp.ne.s32.totalorder %s88, %s89
    %p103 = scmp.eq.s32.totalorder %s15, 1
    %p104 = por %p102, %p103
    %p106 = scmp.ne.s32.totalorder %s89, %s105
    %p107 = scmp.eq.s32.totalorder %s15, 0
    %p108 = por %p106, %p107
    %s109 = ssub.s32 %s16, %s28
    %s110 = ssub.s32 %s17, %s24
    %s111 = sor.u32 %s109, %s110
    %p112 = scmp.eq.s32.totalorder %s111, 0
    %s114 = sadd.s32 %s113, 1
    %s115 = scalar_select %p112, %s113, %s114
    %p118 = pneg %p112
    %p119 = scmp.eq.s32.totalorder %s9, 1
    %p120 = por %p118, %p119
    %p121 = scmp.ne.s32.totalorder %s113, %s116
    %p122 = scmp.eq.s32.totalorder %s9, 0
    %p123 = por %p121, %p122
    %p124 = scmp.ne.s32.totalorder %s113, %s116
    %p125 = scmp.eq.s32.totalorder %s14, 1
    %p126 = por %p124, %p125
    %p127 = scmp.ne.s32.totalorder %s116, %s117
    %p128 = scmp.eq.s32.totalorder %s14, 0
    %p129 = por %p127, %p128
    %p130 = scmp.ne.s32.totalorder %s116, %s117
    %p131 = scmp.eq.s32.totalorder %s15, 1
    %p132 = por %p130, %p131
    %p134 = scmp.ne.s32.totalorder %s117, %s133
    %p135 = scmp.eq.s32.totalorder %s15, 0
    %p136 = por %p134, %p135
    %p137 = scmp.le.s32.totalorder 1, %s9
    %p138 = scmp.lt.s32.totalorder %s9, 3
    %p139 = pnand %p137, %p138
    %p140 = pneg %p139
    // Predicated region
    $region9: #{normalization_forward.1} parent=5 // pred_check
      _
    $region10: #{normalization_forward.1} parent=5 // pred_check_branch
      %142 = sbr.rel (%p139) target = $region12
    $region11: #{normalization_forward.1} parent=5 // pred_region
      %s143 = ssub.s32 %s9, 1
      // Predicated region
      $region13: #{normalization_forward.1} parent=11 // pred_check
        %p144 = pneg %p75
      $region14: #{normalization_forward.1} parent=11 // pred_check_branch
        %146 = sbr.rel (%p144) target = $region16
      $region15: #{normalization_forward.1} parent=11 // pred_region
        %p147 = scmp.lt.s32.totalorder %s18, 0
        %s148 = scalar_select %p147, %s18, 0
        %s149 = smul.addr %s148, 8
        %s150 = scalar_lea.vmem %s1, %s149
      $region16: #{normalization_forward.1} parent=11 // pred_fallthru
        _
      // Predicated region
      $region17: #{normalization_forward.1} parent=11 // pred_check
        %p151 = pneg %p101
      $region18: #{normalization_forward.1} parent=11 // pred_check_branch
        %153 = sbr.rel (%p151) target = $region20
      $region19: #{normalization_forward.1} parent=11 // pred_region
        %p154 = scmp.lt.s32.totalorder %s18, 0
        %s155 = scalar_select %p154, %s18, 0
        %s156 = smul.addr %s155, 8
        %s157 = scalar_lea.vmem %s2, %s156
      $region20: #{normalization_forward.1} parent=11 // pred_fallthru
        _
    $region12: #{normalization_forward.1} parent=5 // pred_fallthru
      _
    %p158 = scmp.lt.s32.totalorder %s9, 2
    // Predicated region
    $region21: #{normalization_forward.1} parent=5 // pred_check
      %p159 = pneg %p158
    $region22: #{normalization_forward.1} parent=5 // pred_check_branch
      %161 = sbr.rel (%p159) target = $region24
    $region23: #{normalization_forward.1} parent=5 // pred_region
      // Predicated region
      $region25: #{normalization_forward.1} parent=23 // pred_check
        %p162 = pneg %p43
      $region26: #{normalization_forward.1} parent=23 // pred_check_branch
        %164 = sbr.rel (%p162) target = $region28
      $region27: #{normalization_forward.1} parent=23 // pred_region
        %p165 = scmp.lt.s32.totalorder %s16, 0
        %s166 = scalar_select %p165, %s16, 0
        %p167 = scmp.lt.s32.totalorder %s17, 1
        %s168 = scalar_select %p167, %s17, 1
        %s169 = smul.addr %s166, 2
        %s170 = sadd.s32 %s168, %s169
        %s171 = smul.addr %s170, 8
        %s172 = scalar_lea.vmem %s0, %s171
      $region28: #{normalization_forward.1} parent=23 // pred_fallthru
        _
    $region24: #{normalization_forward.1} parent=5 // pred_fallthru
      _
    %p173 = scmp.le.s32.totalorder 1, %s9
    %p174 = scmp.lt.s32.totalorder %s9, 3
    %p175 = pnand %p173, %p174
    %p176 = pneg %p175
    // Predicated region
    $region29: #{normalization_forward.1} parent=5 // pred_check
      _
    $region30: #{normalization_forward.1} parent=5 // pred_check_branch
      %178 = sbr.rel (%p175) target = $region32
    $region31: #{normalization_forward.1} parent=5 // pred_region
      %s179 = ssub.s32 %s9, 1
      %p180 = scmp.lt.s32.totalorder %s18, 0
      %s181 = scalar_select %p180, %s18, 0
      %p182 = scmp.lt.s32.totalorder %s19, 1
      %s183 = scalar_select %p182, %s19, 1
      %s184 = smul.addr %s181, 2
      %s185 = sadd.s32 %s183, %s184
      %s186 = smul.addr %s185, 8
      %s187 = scalar_lea.vmem %s0, %s186
      %p188 = pneg %p49
      %p189 = pneg %p46
      %p190 = scmp.lt.s32.totalorder %s18, 0
      %s191 = scalar_select %p190, %s18, 0
      %s192 = smul.addr %s191, 8
      %s193 = scalar_lea.vmem %s1, %s192
      %p194 = pneg %p75
      %p195 = pneg %p72
      %p196 = scmp.lt.s32.totalorder %s18, 0
      %s197 = scalar_select %p196, %s18, 0
      %s198 = smul.addr %s197, 8
      %s199 = scalar_lea.vmem %s2, %s198
      %p200 = pneg %p101
      %p201 = pneg %p98
      %p202 = pneg %p129
      %p203 = pneg %p126
      %p204 = scmp.lt.s32.totalorder %s18, 0
      %s205 = scalar_select %p204, %s18, 0
      %p206 = scmp.lt.s32.totalorder %s19, 1
      %s207 = scalar_select %p206, %s19, 1
      %s208 = smul.addr %s205, 2
      %s209 = sadd.s32 %s207, %s208
      %s210 = smul.addr %s209, 8
      %s211 = scalar_lea.vmem %s3, %s210
      %p212 = scmp.lt.s32.totalorder %s18, 0
      %s213 = scalar_select %p212, %s18, 0
      %p214 = scmp.lt.s32.totalorder %s19, 1
      %s215 = scalar_select %p214, %s19, 1
      %s216 = smul.addr %s213, 2
      %s217 = sadd.s32 %s215, %s216
      %s218 = smul.addr %s217, 8
      %s219 = scalar_lea.vmem %s0, %s218
      %p220 = scmp.lt.s32.totalorder %s18, 0
      %s221 = scalar_select %p220, %s18, 0
      %s222 = smul.addr %s221, 8
      %s223 = scalar_lea.vmem %s1, %s222
      %p224 = scmp.lt.s32.totalorder %s18, 0
      %s225 = scalar_select %p224, %s18, 0
      %s226 = smul.addr %s225, 8
      %s227 = scalar_lea.vmem %s2, %s226
      %p228 = scmp.lt.s32.totalorder %s18, 0
      %s229 = scalar_select %p228, %s18, 0
      %p230 = scmp.lt.s32.totalorder %s19, 1
      %s231 = scalar_select %p230, %s19, 1
      %s232 = smul.addr %s229, 2
      %s233 = sadd.s32 %s231, %s232
      %s234 = smul.addr %s233, 8
      %s235 = scalar_lea.vmem %s3, %s234
      %v236 = vld [vmem:[%s219] sm:$0xff]
      %v237 = vld [vmem:[%s223] sm:$0xff]
      %239 = vset.pattern.permute.xlu0 0
      %240 = vperm.xlu0 %239, %v237
      %v241 = vpop.permute.xlu0 %240
      %v243 = vmul.f32 %v236, %v241
      %v244 = vld [vmem:[%s227] sm:$0xff]
      %246 = vset.pattern.permute.xlu0 0
      %247 = vperm.xlu0 %246, %v244
      %v248 = vpop.permute.xlu0 %247
      %v250 = vadd.f32 %v243, %v248
      %251 = vst [vmem:[%s235] sm:$0xff] %v250
      %p252 = scmp.lt.s32.totalorder %s18, 0
      %s253 = scalar_select %p252, %s18, 0
      %p254 = scmp.lt.s32.totalorder %s19, 1
      %s255 = scalar_select %p254, %s19, 1
      %s256 = smul.addr %s253, 2
      %s257 = sadd.s32 %s255, %s256
      %s258 = smul.addr %s257, 8
      %s259 = scalar_lea.vmem %s3, %s258
      // Predicated region
      $region33: #{normalization_forward.1} parent=31 // pred_check
        %p260 = pneg %p126
      $region34: #{normalization_forward.1} parent=31 // pred_check_branch
        %262 = sbr.rel (%p260) target = $region36
      $region35: #{normalization_forward.1} parent=31 // pred_region
        _
      $region36: #{normalization_forward.1} parent=31 // pred_fallthru
        _
    $region32: #{normalization_forward.1} parent=5 // pred_fallthru
      _
    %p263 = scmp.le.s32.totalorder 2, %s9
    // Predicated region
    $region37: #{normalization_forward.1} parent=5 // pred_check
      %p264 = pneg %p263
    $region38: #{normalization_forward.1} parent=5 // pred_check_branch
      %266 = sbr.rel (%p264) target = $region40
    $region39: #{normalization_forward.1} parent=5 // pred_region
      %s267 = ssub.s32 %s9, 2
      // Predicated region
      $region41: #{normalization_forward.1} parent=39 // pred_check
        %p268 = pneg %p132
      $region42: #{normalization_forward.1} parent=39 // pred_check_branch
        %270 = sbr.rel (%p268) target = $region44
      $region43: #{normalization_forward.1} parent=39 // pred_region
        %p271 = scmp.lt.s32.totalorder %s20, 0
        %s272 = scalar_select %p271, %s20, 0
        %p273 = scmp.lt.s32.totalorder %s21, 1
        %s274 = scalar_select %p273, %s21, 1
        %s275 = smul.addr %s272, 2
        %s276 = sadd.s32 %s274, %s275
        %s277 = smul.addr %s276, 8
        %s278 = scalar_lea.vmem %s3, %s277
      $region44: #{normalization_forward.1} parent=39 // pred_fallthru
        _
    $region40: #{normalization_forward.1} parent=5 // pred_fallthru
      _
  $region6: #{normalization_forward.1} parent=0 // loop_footer
    %s13 = sadd.s32 1, %s9
  $region7: #{normalization_forward.1} parent=0 // loop_footer_branch
    %8 = sbr.rel target = $region3
  $region8: #{normalization_forward.1} parent=0 // loop_exit
    _

</llo_original>
